<compile_context>
chip_gen: v5e
topology: v5e:2x2
jax: 0.10.0
libtpu: 0.0.40
codegen_flags: <defaults>
</compile_context>

<pallas_src>
import functools

import jax
import jax.numpy as jnp
import numpy as np
from jax.experimental import pallas as pl
from jax.experimental.pallas import tpu as pltpu


# ------------------------------- kernel --------------------------------------

def _inception_kernel(x_ref, wred_ref, wbig_ref, o_ref, *, H, W, ch1x1):
    # x_ref   : (1, Cin, H*W)              input image, channel-major, flat spatial
    # wred_ref: (ch1x1+ch3x3red+ch5x5red, Cin)   fused 1x1 weights (transposed)
    # wbig_ref: (ch3x3+ch5x5+pool_proj, 9*(ch3x3red+ch5x5red)+Cin)
    # o_ref   : (1, ch1x1+ch3x3+ch5x5+pool_proj, H*W)   NCHW output (flat spatial)
    HW = H * W
    x = x_ref[0].astype(jnp.float32)                       # (Cin, HW)

    # ---- fused 1x1 convs + ReLU: [branch1 | branch2-reduce | branch3-reduce] --
    red = jnp.maximum(
        jnp.dot(wred_ref[...], x, preferred_element_type=jnp.float32), 0.0)
    o_ref[0, 0:ch1x1, :] = red[0:ch1x1, :].astype(o_ref.dtype)   # branch1 (lane-dense)
    xr = red[ch1x1:, :]                                    # (ch3x3red+ch5x5red, HW)

    # ---- spatial-shift helper (halo handled with roll + mask, no padding) ----
    k = jax.lax.broadcasted_iota(jnp.int32, (1, HW), 1)    # flattened pixel index
    if W & (W - 1) == 0:
        col = jnp.bitwise_and(k, W - 1)                    # j = k % W (W is pow2)
    else:
        col = jax.lax.rem(k, W)

    def shift_image(img, dy, dx, fill):
        """img: (C, H*W) row-major.  Returns y with
        y[c, i*W+j] = img[c, (i+dy)*W + (j+dx)] when the source pixel lies
        inside the HxW image, else `fill`.  dy/dx are static ints."""
        if dy == 0 and dx == 0:
            return img
        off = dy * W + dx
        rolled = pltpu.roll(img, shift=(-off) % HW, axis=1)     # XLU lane rotate
        valid = ((k >= -dy * W) & (k < (H - dy) * W) &          # row in range
                 (col + dx >= 0) & (col + dx < W))              # col in range
        return jnp.where(valid, rolled, fill)

    # ---- im2col slabs for BOTH 3x3 branches (zero halo) ----------------------
    slabs = [shift_image(xr, dy, dx, 0.0)
             for dy in (-1, 0, 1) for dx in (-1, 0, 1)]    # 9 x (ch3x3red+ch5x5red, HW)

    # ---- branch4: separable 3x3 max-pool (stride 1, pad 1) on the raw input --
    neg = jnp.finfo(jnp.float32).min                       # safe "-inf" pad value
    rmax = jnp.maximum(x, jnp.maximum(shift_image(x, 0, -1, neg),
                                      shift_image(x, 0, 1, neg)))
    pooled = jnp.maximum(rmax, jnp.maximum(shift_image(rmax, -1, 0, neg),
                                           shift_image(rmax, 1, 0, neg)))

    # ---- one big matmul: [branch2 | branch3 | branch4-proj] + ReLU ------------
    rhs = jnp.concatenate(slabs + [pooled], axis=0)        # (9*Cr + Cin, HW)
    big = jnp.maximum(
        jnp.dot(wbig_ref[...], rhs, preferred_element_type=jnp.float32), 0.0)
    o_ref[0, ch1x1:, :] = big.astype(o_ref.dtype)          # branches 2,3,4 (lane-dense)


# --------------------------- weight packing (host) ----------------------------

def _pack_weights(params):
    w1  = params["w1"]        # (Cin, ch1x1)
    w2r = params["w2_red"]    # (Cin, ch3x3red)
    w2  = params["w2_3x3"]    # (3, 3, ch3x3red, ch3x3)
    w3r = params["w3_red"]    # (Cin, ch5x5red)
    w3  = params["w3_3x3"]    # (3, 3, ch5x5red, ch5x5)
    w4  = params["w4_proj"]   # (Cin, pool_proj)

    cin = w1.shape[0]
    c2r, c2 = w2.shape[2], w2.shape[3]
    c3r, c3 = w3.shape[2], w3.shape[3]
    cp = w4.shape[1]
    cr = c2r + c3r

    # fused 1x1-reduction weight, channel-major: rows = [b1 | b2-red | b3-red]
    wred = jnp.concatenate([w1.T, w2r.T, w3r.T], axis=0)          # (ch1x1+cr, Cin)

    # fused "big" weight: rows = [b2 out | b3 out | b4 out]
    # cols = 9 im2col taps of (b2-red | b3-red) channels, then the Cin pooled
    # channels.  Tap s = ky*3 + kx matches the kernel's (dy, dx) loop order.
    wbig = jnp.zeros((c2 + c3 + cp, 9 * cr + cin), w2.dtype)
    for ky in range(3):
        for kx in range(3):
            s = ky * 3 + kx
            wbig = wbig.at[:c2, s * cr:s * cr + c2r].set(w2[ky, kx].T)
            wbig = wbig.at[c2:c2 + c3, s * cr + c2r:(s + 1) * cr].set(w3[ky, kx].T)
    wbig = wbig.at[c2 + c3:, 9 * cr:].set(w4.T)
    return wred, wbig


# ------------------------------- wrapper --------------------------------------

def inception_forward(x_nchw, params):
    """Matches Inception.forward: NCHW in, NCHW out, channels ordered
    [branch1, branch2, branch3, branch4]."""
    N, Cin, H, W = x_nchw.shape
    HW = H * W
    ch1x1 = params["w1"].shape[1]
    ch3x3 = params["w2_3x3"].shape[3]
    ch5x5 = params["w3_3x3"].shape[3]
    pool_proj = params["w4_proj"].shape[1]
    c_total = ch1x1 + ch3x3 + ch5x5 + pool_proj

    wred, wbig = _pack_weights(params)
    x_flat = x_nchw.reshape(N, Cin, HW)                    # free, stays NCHW

    out = pl.pallas_call(
        functools.partial(_inception_kernel, H=H, W=W, ch1x1=ch1x1),
        out_shape=jax.ShapeDtypeStruct((N, c_total, HW), x_nchw.dtype),
        grid=(N,),
        in_specs=[
            pl.BlockSpec((1, Cin, HW), lambda n: (n, 0, 0)),
            pl.BlockSpec(wred.shape, lambda n: (0, 0)),
            pl.BlockSpec(wbig.shape, lambda n: (0, 0)),
        ],
        out_specs=pl.BlockSpec((1, c_total, HW), lambda n: (n, 0, 0)),
        compiler_params=pltpu.CompilerParams(
            dimension_semantics=("parallel",)),
    )(x_flat, wred, wbig)
    return out.reshape(N, c_total, H, W)                   # already NCHW


# --------------------------- pure-JAX reference --------------------------------

def _ref_inception(x_nchw, params):
    x = jnp.transpose(x_nchw, (0, 2, 3, 1))
    dn = ("NHWC", "HWIO", "NHWC")

    def c(xa, w, pad):
        return jax.lax.conv_general_dilated(
            xa, w, (1, 1), [(pad, pad), (pad, pad)], dimension_numbers=dn)

    relu = lambda a: jnp.maximum(a, 0.0)
    b1 = relu(c(x, params["w1"][None, None], 0))
    b2 = relu(c(x, params["w2_red"][None, None], 0))
    b2 = relu(c(b2, params["w2_3x3"], 1))
    b3 = relu(c(x, params["w3_red"][None, None], 0))
    b3 = relu(c(b3, params["w3_3x3"], 1))
    pooled = jax.lax.reduce_window(
        x, -jnp.inf, jax.lax.max, (1, 3, 3, 1), (1, 1, 1, 1),
        [(0, 0), (1, 1), (1, 1), (0, 0)])
    b4 = relu(c(pooled, params["w4_proj"][None, None], 0))
    out = jnp.concatenate([b1, b2, b3, b4], axis=-1)
    return jnp.transpose(out, (0, 3, 1, 2))


# --------------------------------- main ----------------------------------------

if __name__ == "__main__":
    # Inception(in_channels=4, ch1x1=8, ch3x3red=8, ch3x3=16,
    #           ch5x5red=4, ch5x5=8, pool_proj=8)
    N, Cin, H, W = 2, 4, 16, 16
    ch1x1, ch3x3red, ch3x3, ch5x5red, ch5x5, pool_proj = 8, 8, 16, 4, 8, 8

    key = jax.random.PRNGKey(0)
    ks = jax.random.split(key, 8)
    x = jax.random.normal(ks[0], (N, Cin, H, W), jnp.float32)
    params = {
        "w1":      0.1 * jax.random.normal(ks[1], (Cin, ch1x1), jnp.float32),
        "w2_red":  0.1 * jax.random.normal(ks[2], (Cin, ch3x3red), jnp.float32),
        "w2_3x3":  0.1 * jax.random.normal(ks[3], (3, 3, ch3x3red, ch3x3), jnp.float32),
        "w3_red":  0.1 * jax.random.normal(ks[4], (Cin, ch5x5red), jnp.float32),
        "w3_3x3":  0.1 * jax.random.normal(ks[5], (3, 3, ch5x5red, ch5x5), jnp.float32),
        "w4_proj": 0.1 * jax.random.normal(ks[6], (Cin, pool_proj), jnp.float32),
    }

    fwd = jax.jit(inception_forward)
    out = jax.block_until_ready(fwd(x, params))
    assert out.shape == (N, ch1x1 + ch3x3 + ch5x5 + pool_proj, H, W), out.shape

    ref = jax.block_until_ready(_ref_inception(x, params))
    np.testing.assert_allclose(np.asarray(out), np.asarray(ref),
                               rtol=1e-4, atol=1e-4)
    print("KERNEL_OK")
</pallas_src>

<mosaic_0001>
module attributes {stable_mosaic.version = 11 : i64} {
  func.func @_inception_kernel(%arg0: i32, %arg1: memref<1x4x256xf32, #tpu.memory_space<vmem>>, %arg2: memref<20x4xf32, #tpu.memory_space<vmem>>, %arg3: memref<32x112xf32, #tpu.memory_space<vmem>>, %arg4: memref<1x40x256xf32, #tpu.memory_space<vmem>>) attributes {dimension_semantics = [#tpu.dimension_semantics<parallel>], iteration_bounds = array<i64: 2>, scalar_prefetch = 0 : i64, scratch_operands = 0 : i64, tpu.core_type = #tpu.core_type<tc>, window_params = [{transform_indices = @transform_0, window_bounds = array<i64: 1, 4, 256>}, {pipeline_mode = #tpu.pipeline_mode<synchronous>, transform_indices = @transform_1, window_bounds = array<i64: 20, 4>}, {pipeline_mode = #tpu.pipeline_mode<synchronous>, transform_indices = @transform_2, window_bounds = array<i64: 32, 112>}, {transform_indices = @transform_3, window_bounds = array<i64: 1, 40, 256>}]} {
    %c0 = arith.constant 0 : index
    %c0_0 = arith.constant 0 : index
    %c0_1 = arith.constant 0 : index
    %0 = vector.load %arg1[%c0, %c0_0, %c0_1] : memref<1x4x256xf32, #tpu.memory_space<vmem>>, vector<1x4x256xf32>
    %1 = vector.shape_cast %0 : vector<1x4x256xf32> to vector<4x256xf32>
    %c0_2 = arith.constant 0 : index
    %c0_3 = arith.constant 0 : index
    %2 = vector.load %arg2[%c0_2, %c0_3] : memref<20x4xf32, #tpu.memory_space<vmem>>, vector<20x4xf32>
    %cst = arith.constant dense<0.000000e+00> : vector<20x256xf32>
    %3 = tpu.matmul %2, %1, %cst {dimension_numbers = #tpu.dot_dimension_numbers<[1], [0], [0], [1], [0, 0, 1, 1], [], []>} : vector<20x4xf32>, vector<4x256xf32>, vector<20x256xf32> -> vector<20x256xf32>
    %cst_4 = arith.constant 0.000000e+00 : f32
    %4 = vector.broadcast %cst_4 : f32 to vector<20x256xf32>
    %5 = arith.maximumf %3, %4 : vector<20x256xf32>
    %6 = vector.extract_strided_slice %5 {offsets = [0, 0], sizes = [8, 256], strides = [1, 1]} : vector<20x256xf32> to vector<8x256xf32>
    %c0_5 = arith.constant 0 : index
    %c0_6 = arith.constant 0 : index
    %c0_7 = arith.constant 0 : index
    %7 = vector.load %arg4[%c0_5, %c0_6, %c0_7] : memref<1x40x256xf32, #tpu.memory_space<vmem>>, vector<1x8x256xf32>
    %8 = vector.shape_cast %7 : vector<1x8x256xf32> to vector<8x256xf32>
    %9 = vector.shape_cast %6 : vector<8x256xf32> to vector<1x8x256xf32>
    tpu.vector_store %arg4[%c0_5, %c0_6, %c0_7], %9 {strides = array<i32>} : memref<1x40x256xf32, #tpu.memory_space<vmem>>, vector<1x8x256xf32>,
    %10 = vector.extract_strided_slice %5 {offsets = [8, 0], sizes = [12, 256], strides = [1, 1]} : vector<20x256xf32> to vector<12x256xf32>
    %11 = tpu.iota {dimensions = array<i32: 1>} : vector<1x256xi32>
    %c15_i32 = arith.constant 15 : i32
    %12 = vector.broadcast %c15_i32 : i32 to vector<1x256xi32>
    %13 = arith.andi %11, %12 : vector<1x256xi32>
    %c17_i32 = arith.constant 17 : i32
    %14 = tpu.dynamic_rotate %10 by %c17_i32 dim 1 : vector<12x256xf32>, i32 -> vector<12x256xf32>
    %c16_i32 = arith.constant 16 : i32
    %15 = vector.broadcast %c16_i32 : i32 to vector<1x256xi32>
    %16 = arith.cmpi sge, %11, %15 : vector<1x256xi32>
    %c272_i32 = arith.constant 272 : i32
    %17 = vector.broadcast %c272_i32 : i32 to vector<1x256xi32>
    %18 = arith.cmpi slt, %11, %17 : vector<1x256xi32>
    %19 = arith.andi %16, %18 : vector<1x256xi1>
    %c-1_i32 = arith.constant -1 : i32
    %20 = vector.broadcast %c-1_i32 : i32 to vector<1x256xi32>
    %21 = arith.addi %13, %20 : vector<1x256xi32>
    %c0_i32 = arith.constant 0 : i32
    %22 = vector.broadcast %c0_i32 : i32 to vector<1x256xi32>
    %23 = arith.cmpi sge, %21, %22 : vector<1x256xi32>
    %24 = arith.andi %19, %23 : vector<1x256xi1>
    %c-1_i32_8 = arith.constant -1 : i32
    %25 = vector.broadcast %c-1_i32_8 : i32 to vector<1x256xi32>
    %26 = arith.addi %13, %25 : vector<1x256xi32>
    %c16_i32_9 = arith.constant 16 : i32
    %27 = vector.broadcast %c16_i32_9 : i32 to vector<1x256xi32>
    %28 = arith.cmpi slt, %26, %27 : vector<1x256xi32>
    %29 = arith.andi %24, %28 : vector<1x256xi1>
    %cst_10 = arith.constant 0.000000e+00 : f32
    %30 = vector.shape_cast %29 : vector<1x256xi1> to vector<1x256xi1>
    %31 = vector.broadcast %30 : vector<1x256xi1> to vector<12x256xi1>
    %32 = vector.broadcast %cst_10 : f32 to vector<12x256xf32>
    %33 = arith.select %31, %14, %32 : vector<12x256xi1>, vector<12x256xf32>
    %c16_i32_11 = arith.constant 16 : i32
    %34 = tpu.dynamic_rotate %10 by %c16_i32_11 dim 1 : vector<12x256xf32>, i32 -> vector<12x256xf32>
    %c16_i32_12 = arith.constant 16 : i32
    %35 = vector.broadcast %c16_i32_12 : i32 to vector<1x256xi32>
    %36 = arith.cmpi sge, %11, %35 : vector<1x256xi32>
    %c272_i32_13 = arith.constant 272 : i32
    %37 = vector.broadcast %c272_i32_13 : i32 to vector<1x256xi32>
    %38 = arith.cmpi slt, %11, %37 : vector<1x256xi32>
    %39 = arith.andi %36, %38 : vector<1x256xi1>
    %c0_i32_14 = arith.constant 0 : i32
    %40 = vector.broadcast %c0_i32_14 : i32 to vector<1x256xi32>
    %41 = arith.addi %13, %40 : vector<1x256xi32>
    %c0_i32_15 = arith.constant 0 : i32
    %42 = vector.broadcast %c0_i32_15 : i32 to vector<1x256xi32>
    %43 = arith.cmpi sge, %41, %42 : vector<1x256xi32>
    %44 = arith.andi %39, %43 : vector<1x256xi1>
    %c0_i32_16 = arith.constant 0 : i32
    %45 = vector.broadcast %c0_i32_16 : i32 to vector<1x256xi32>
    %46 = arith.addi %13, %45 : vector<1x256xi32>
    %c16_i32_17 = arith.constant 16 : i32
    %47 = vector.broadcast %c16_i32_17 : i32 to vector<1x256xi32>
    %48 = arith.cmpi slt, %46, %47 : vector<1x256xi32>
    %49 = arith.andi %44, %48 : vector<1x256xi1>
    %cst_18 = arith.constant 0.000000e+00 : f32
    %50 = vector.shape_cast %49 : vector<1x256xi1> to vector<1x256xi1>
    %51 = vector.broadcast %50 : vector<1x256xi1> to vector<12x256xi1>
    %52 = vector.broadcast %cst_18 : f32 to vector<12x256xf32>
    %53 = arith.select %51, %34, %52 : vector<12x256xi1>, vector<12x256xf32>
    %c15_i32_19 = arith.constant 15 : i32
    %54 = tpu.dynamic_rotate %10 by %c15_i32_19 dim 1 : vector<12x256xf32>, i32 -> vector<12x256xf32>
    %c16_i32_20 = arith.constant 16 : i32
    %55 = vector.broadcast %c16_i32_20 : i32 to vector<1x256xi32>
    %56 = arith.cmpi sge, %11, %55 : vector<1x256xi32>
    %c272_i32_21 = arith.constant 272 : i32
    %57 = vector.broadcast %c272_i32_21 : i32 to vector<1x256xi32>
    %58 = arith.cmpi slt, %11, %57 : vector<1x256xi32>
    %59 = arith.andi %56, %58 : vector<1x256xi1>
    %c1_i32 = arith.constant 1 : i32
    %60 = vector.broadcast %c1_i32 : i32 to vector<1x256xi32>
    %61 = arith.addi %13, %60 : vector<1x256xi32>
    %c0_i32_22 = arith.constant 0 : i32
    %62 = vector.broadcast %c0_i32_22 : i32 to vector<1x256xi32>
    %63 = arith.cmpi sge, %61, %62 : vector<1x256xi32>
    %64 = arith.andi %59, %63 : vector<1x256xi1>
    %c1_i32_23 = arith.constant 1 : i32
    %65 = vector.broadcast %c1_i32_23 : i32 to vector<1x256xi32>
    %66 = arith.addi %13, %65 : vector<1x256xi32>
    %c16_i32_24 = arith.constant 16 : i32
    %67 = vector.broadcast %c16_i32_24 : i32 to vector<1x256xi32>
    %68 = arith.cmpi slt, %66, %67 : vector<1x256xi32>
    %69 = arith.andi %64, %68 : vector<1x256xi1>
    %cst_25 = arith.constant 0.000000e+00 : f32
    %70 = vector.shape_cast %69 : vector<1x256xi1> to vector<1x256xi1>
    %71 = vector.broadcast %70 : vector<1x256xi1> to vector<12x256xi1>
    %72 = vector.broadcast %cst_25 : f32 to vector<12x256xf32>
    %73 = arith.select %71, %54, %72 : vector<12x256xi1>, vector<12x256xf32>
    %c1_i32_26 = arith.constant 1 : i32
    %74 = tpu.dynamic_rotate %10 by %c1_i32_26 dim 1 : vector<12x256xf32>, i32 -> vector<12x256xf32>
    %c0_i32_27 = arith.constant 0 : i32
    %75 = vector.broadcast %c0_i32_27 : i32 to vector<1x256xi32>
    %76 = arith.cmpi sge, %11, %75 : vector<1x256xi32>
    %c256_i32 = arith.constant 256 : i32
    %77 = vector.broadcast %c256_i32 : i32 to vector<1x256xi32>
    %78 = arith.cmpi slt, %11, %77 : vector<1x256xi32>
    %79 = arith.andi %76, %78 : vector<1x256xi1>
    %c-1_i32_28 = arith.constant -1 : i32
    %80 = vector.broadcast %c-1_i32_28 : i32 to vector<1x256xi32>
    %81 = arith.addi %13, %80 : vector<1x256xi32>
    %c0_i32_29 = arith.constant 0 : i32
    %82 = vector.broadcast %c0_i32_29 : i32 to vector<1x256xi32>
    %83 = arith.cmpi sge, %81, %82 : vector<1x256xi32>
    %84 = arith.andi %79, %83 : vector<1x256xi1>
    %c-1_i32_30 = arith.constant -1 : i32
    %85 = vector.broadcast %c-1_i32_30 : i32 to vector<1x256xi32>
    %86 = arith.addi %13, %85 : vector<1x256xi32>
    %c16_i32_31 = arith.constant 16 : i32
    %87 = vector.broadcast %c16_i32_31 : i32 to vector<1x256xi32>
    %88 = arith.cmpi slt, %86, %87 : vector<1x256xi32>
    %89 = arith.andi %84, %88 : vector<1x256xi1>
    %cst_32 = arith.constant 0.000000e+00 : f32
    %90 = vector.shape_cast %89 : vector<1x256xi1> to vector<1x256xi1>
    %91 = vector.broadcast %90 : vector<1x256xi1> to vector<12x256xi1>
    %92 = vector.broadcast %cst_32 : f32 to vector<12x256xf32>
    %93 = arith.select %91, %74, %92 : vector<12x256xi1>, vector<12x256xf32>
    %c255_i32 = arith.constant 255 : i32
    %94 = tpu.dynamic_rotate %10 by %c255_i32 dim 1 : vector<12x256xf32>, i32 -> vector<12x256xf32>
    %c0_i32_33 = arith.constant 0 : i32
    %95 = vector.broadcast %c0_i32_33 : i32 to vector<1x256xi32>
    %96 = arith.cmpi sge, %11, %95 : vector<1x256xi32>
    %c256_i32_34 = arith.constant 256 : i32
    %97 = vector.broadcast %c256_i32_34 : i32 to vector<1x256xi32>
    %98 = arith.cmpi slt, %11, %97 : vector<1x256xi32>
    %99 = arith.andi %96, %98 : vector<1x256xi1>
    %c1_i32_35 = arith.constant 1 : i32
    %100 = vector.broadcast %c1_i32_35 : i32 to vector<1x256xi32>
    %101 = arith.addi %13, %100 : vector<1x256xi32>
    %c0_i32_36 = arith.constant 0 : i32
    %102 = vector.broadcast %c0_i32_36 : i32 to vector<1x256xi32>
    %103 = arith.cmpi sge, %101, %102 : vector<1x256xi32>
    %104 = arith.andi %99, %103 : vector<1x256xi1>
    %c1_i32_37 = arith.constant 1 : i32
    %105 = vector.broadcast %c1_i32_37 : i32 to vector<1x256xi32>
    %106 = arith.addi %13, %105 : vector<1x256xi32>
    %c16_i32_38 = arith.constant 16 : i32
    %107 = vector.broadcast %c16_i32_38 : i32 to vector<1x256xi32>
    %108 = arith.cmpi slt, %106, %107 : vector<1x256xi32>
    %109 = arith.andi %104, %108 : vector<1x256xi1>
    %cst_39 = arith.constant 0.000000e+00 : f32
    %110 = vector.shape_cast %109 : vector<1x256xi1> to vector<1x256xi1>
    %111 = vector.broadcast %110 : vector<1x256xi1> to vector<12x256xi1>
    %112 = vector.broadcast %cst_39 : f32 to vector<12x256xf32>
    %113 = arith.select %111, %94, %112 : vector<12x256xi1>, vector<12x256xf32>
    %c241_i32 = arith.constant 241 : i32
    %114 = tpu.dynamic_rotate %10 by %c241_i32 dim 1 : vector<12x256xf32>, i32 -> vector<12x256xf32>
    %c-16_i32 = arith.constant -16 : i32
    %115 = vector.broadcast %c-16_i32 : i32 to vector<1x256xi32>
    %116 = arith.cmpi sge, %11, %115 : vector<1x256xi32>
    %c240_i32 = arith.constant 240 : i32
    %117 = vector.broadcast %c240_i32 : i32 to vector<1x256xi32>
    %118 = arith.cmpi slt, %11, %117 : vector<1x256xi32>
    %119 = arith.andi %116, %118 : vector<1x256xi1>
    %c-1_i32_40 = arith.constant -1 : i32
    %120 = vector.broadcast %c-1_i32_40 : i32 to vector<1x256xi32>
    %121 = arith.addi %13, %120 : vector<1x256xi32>
    %c0_i32_41 = arith.constant 0 : i32
    %122 = vector.broadcast %c0_i32_41 : i32 to vector<1x256xi32>
    %123 = arith.cmpi sge, %121, %122 : vector<1x256xi32>
    %124 = arith.andi %119, %123 : vector<1x256xi1>
    %c-1_i32_42 = arith.constant -1 : i32
    %125 = vector.broadcast %c-1_i32_42 : i32 to vector<1x256xi32>
    %126 = arith.addi %13, %125 : vector<1x256xi32>
    %c16_i32_43 = arith.constant 16 : i32
    %127 = vector.broadcast %c16_i32_43 : i32 to vector<1x256xi32>
    %128 = arith.cmpi slt, %126, %127 : vector<1x256xi32>
    %129 = arith.andi %124, %128 : vector<1x256xi1>
    %cst_44 = arith.constant 0.000000e+00 : f32
    %130 = vector.shape_cast %129 : vector<1x256xi1> to vector<1x256xi1>
    %131 = vector.broadcast %130 : vector<1x256xi1> to vector<12x256xi1>
    %132 = vector.broadcast %cst_44 : f32 to vector<12x256xf32>
    %133 = arith.select %131, %114, %132 : vector<12x256xi1>, vector<12x256xf32>
    %c240_i32_45 = arith.constant 240 : i32
    %134 = tpu.dynamic_rotate %10 by %c240_i32_45 dim 1 : vector<12x256xf32>, i32 -> vector<12x256xf32>
    %c-16_i32_46 = arith.constant -16 : i32
    %135 = vector.broadcast %c-16_i32_46 : i32 to vector<1x256xi32>
    %136 = arith.cmpi sge, %11, %135 : vector<1x256xi32>
    %c240_i32_47 = arith.constant 240 : i32
    %137 = vector.broadcast %c240_i32_47 : i32 to vector<1x256xi32>
    %138 = arith.cmpi slt, %11, %137 : vector<1x256xi32>
    %139 = arith.andi %136, %138 : vector<1x256xi1>
    %c0_i32_48 = arith.constant 0 : i32
    %140 = vector.broadcast %c0_i32_48 : i32 to vector<1x256xi32>
    %141 = arith.addi %13, %140 : vector<1x256xi32>
    %c0_i32_49 = arith.constant 0 : i32
    %142 = vector.broadcast %c0_i32_49 : i32 to vector<1x256xi32>
    %143 = arith.cmpi sge, %141, %142 : vector<1x256xi32>
    %144 = arith.andi %139, %143 : vector<1x256xi1>
    %c0_i32_50 = arith.constant 0 : i32
    %145 = vector.broadcast %c0_i32_50 : i32 to vector<1x256xi32>
    %146 = arith.addi %13, %145 : vector<1x256xi32>
    %c16_i32_51 = arith.constant 16 : i32
    %147 = vector.broadcast %c16_i32_51 : i32 to vector<1x256xi32>
    %148 = arith.cmpi slt, %146, %147 : vector<1x256xi32>
    %149 = arith.andi %144, %148 : vector<1x256xi1>
    %cst_52 = arith.constant 0.000000e+00 : f32
    %150 = vector.shape_cast %149 : vector<1x256xi1> to vector<1x256xi1>
    %151 = vector.broadcast %150 : vector<1x256xi1> to vector<12x256xi1>
    %152 = vector.broadcast %cst_52 : f32 to vector<12x256xf32>
    %153 = arith.select %151, %134, %152 : vector<12x256xi1>, vector<12x256xf32>
    %c239_i32 = arith.constant 239 : i32
    %154 = tpu.dynamic_rotate %10 by %c239_i32 dim 1 : vector<12x256xf32>, i32 -> vector<12x256xf32>
    %c-16_i32_53 = arith.constant -16 : i32
    %155 = vector.broadcast %c-16_i32_53 : i32 to vector<1x256xi32>
    %156 = arith.cmpi sge, %11, %155 : vector<1x256xi32>
    %c240_i32_54 = arith.constant 240 : i32
    %157 = vector.broadcast %c240_i32_54 : i32 to vector<1x256xi32>
    %158 = arith.cmpi slt, %11, %157 : vector<1x256xi32>
    %159 = arith.andi %156, %158 : vector<1x256xi1>
    %c1_i32_55 = arith.constant 1 : i32
    %160 = vector.broadcast %c1_i32_55 : i32 to vector<1x256xi32>
    %161 = arith.addi %13, %160 : vector<1x256xi32>
    %c0_i32_56 = arith.constant 0 : i32
    %162 = vector.broadcast %c0_i32_56 : i32 to vector<1x256xi32>
    %163 = arith.cmpi sge, %161, %162 : vector<1x256xi32>
    %164 = arith.andi %159, %163 : vector<1x256xi1>
    %c1_i32_57 = arith.constant 1 : i32
    %165 = vector.broadcast %c1_i32_57 : i32 to vector<1x256xi32>
    %166 = arith.addi %13, %165 : vector<1x256xi32>
    %c16_i32_58 = arith.constant 16 : i32
    %167 = vector.broadcast %c16_i32_58 : i32 to vector<1x256xi32>
    %168 = arith.cmpi slt, %166, %167 : vector<1x256xi32>
    %169 = arith.andi %164, %168 : vector<1x256xi1>
    %cst_59 = arith.constant 0.000000e+00 : f32
    %170 = vector.shape_cast %169 : vector<1x256xi1> to vector<1x256xi1>
    %171 = vector.broadcast %170 : vector<1x256xi1> to vector<12x256xi1>
    %172 = vector.broadcast %cst_59 : f32 to vector<12x256xf32>
    %173 = arith.select %171, %154, %172 : vector<12x256xi1>, vector<12x256xf32>
    %c1_i32_60 = arith.constant 1 : i32
    %174 = tpu.dynamic_rotate %1 by %c1_i32_60 dim 1 : vector<4x256xf32>, i32 -> vector<4x256xf32>
    %c0_i32_61 = arith.constant 0 : i32
    %175 = vector.broadcast %c0_i32_61 : i32 to vector<1x256xi32>
    %176 = arith.cmpi sge, %11, %175 : vector<1x256xi32>
    %c256_i32_62 = arith.constant 256 : i32
    %177 = vector.broadcast %c256_i32_62 : i32 to vector<1x256xi32>
    %178 = arith.cmpi slt, %11, %177 : vector<1x256xi32>
    %179 = arith.andi %176, %178 : vector<1x256xi1>
    %c-1_i32_63 = arith.constant -1 : i32
    %180 = vector.broadcast %c-1_i32_63 : i32 to vector<1x256xi32>
    %181 = arith.addi %13, %180 : vector<1x256xi32>
    %c0_i32_64 = arith.constant 0 : i32
    %182 = vector.broadcast %c0_i32_64 : i32 to vector<1x256xi32>
    %183 = arith.cmpi sge, %181, %182 : vector<1x256xi32>
    %184 = arith.andi %179, %183 : vector<1x256xi1>
    %c-1_i32_65 = arith.constant -1 : i32
    %185 = vector.broadcast %c-1_i32_65 : i32 to vector<1x256xi32>
    %186 = arith.addi %13, %185 : vector<1x256xi32>
    %c16_i32_66 = arith.constant 16 : i32
    %187 = vector.broadcast %c16_i32_66 : i32 to vector<1x256xi32>
    %188 = arith.cmpi slt, %186, %187 : vector<1x256xi32>
    %189 = arith.andi %184, %188 : vector<1x256xi1>
    %cst_67 = arith.constant -3.40282347E+38 : f32
    %190 = vector.shape_cast %189 : vector<1x256xi1> to vector<1x256xi1>
    %191 = vector.broadcast %190 : vector<1x256xi1> to vector<4x256xi1>
    %192 = vector.broadcast %cst_67 : f32 to vector<4x256xf32>
    %193 = arith.select %191, %174, %192 : vector<4x256xi1>, vector<4x256xf32>
    %c255_i32_68 = arith.constant 255 : i32
    %194 = tpu.dynamic_rotate %1 by %c255_i32_68 dim 1 : vector<4x256xf32>, i32 -> vector<4x256xf32>
    %c0_i32_69 = arith.constant 0 : i32
    %195 = vector.broadcast %c0_i32_69 : i32 to vector<1x256xi32>
    %196 = arith.cmpi sge, %11, %195 : vector<1x256xi32>
    %c256_i32_70 = arith.constant 256 : i32
    %197 = vector.broadcast %c256_i32_70 : i32 to vector<1x256xi32>
    %198 = arith.cmpi slt, %11, %197 : vector<1x256xi32>
    %199 = arith.andi %196, %198 : vector<1x256xi1>
    %c1_i32_71 = arith.constant 1 : i32
    %200 = vector.broadcast %c1_i32_71 : i32 to vector<1x256xi32>
    %201 = arith.addi %13, %200 : vector<1x256xi32>
    %c0_i32_72 = arith.constant 0 : i32
    %202 = vector.broadcast %c0_i32_72 : i32 to vector<1x256xi32>
    %203 = arith.cmpi sge, %201, %202 : vector<1x256xi32>
    %204 = arith.andi %199, %203 : vector<1x256xi1>
    %c1_i32_73 = arith.constant 1 : i32
    %205 = vector.broadcast %c1_i32_73 : i32 to vector<1x256xi32>
    %206 = arith.addi %13, %205 : vector<1x256xi32>
    %c16_i32_74 = arith.constant 16 : i32
    %207 = vector.broadcast %c16_i32_74 : i32 to vector<1x256xi32>
    %208 = arith.cmpi slt, %206, %207 : vector<1x256xi32>
    %209 = arith.andi %204, %208 : vector<1x256xi1>
    %cst_75 = arith.constant -3.40282347E+38 : f32
    %210 = vector.shape_cast %209 : vector<1x256xi1> to vector<1x256xi1>
    %211 = vector.broadcast %210 : vector<1x256xi1> to vector<4x256xi1>
    %212 = vector.broadcast %cst_75 : f32 to vector<4x256xf32>
    %213 = arith.select %211, %194, %212 : vector<4x256xi1>, vector<4x256xf32>
    %214 = arith.maximumf %193, %213 : vector<4x256xf32>
    %215 = arith.maximumf %1, %214 : vector<4x256xf32>
    %c16_i32_76 = arith.constant 16 : i32
    %216 = tpu.dynamic_rotate %215 by %c16_i32_76 dim 1 : vector<4x256xf32>, i32 -> vector<4x256xf32>
    %c16_i32_77 = arith.constant 16 : i32
    %217 = vector.broadcast %c16_i32_77 : i32 to vector<1x256xi32>
    %218 = arith.cmpi sge, %11, %217 : vector<1x256xi32>
    %c272_i32_78 = arith.constant 272 : i32
    %219 = vector.broadcast %c272_i32_78 : i32 to vector<1x256xi32>
    %220 = arith.cmpi slt, %11, %219 : vector<1x256xi32>
    %221 = arith.andi %218, %220 : vector<1x256xi1>
    %c0_i32_79 = arith.constant 0 : i32
    %222 = vector.broadcast %c0_i32_79 : i32 to vector<1x256xi32>
    %223 = arith.addi %13, %222 : vector<1x256xi32>
    %c0_i32_80 = arith.constant 0 : i32
    %224 = vector.broadcast %c0_i32_80 : i32 to vector<1x256xi32>
    %225 = arith.cmpi sge, %223, %224 : vector<1x256xi32>
    %226 = arith.andi %221, %225 : vector<1x256xi1>
    %c0_i32_81 = arith.constant 0 : i32
    %227 = vector.broadcast %c0_i32_81 : i32 to vector<1x256xi32>
    %228 = arith.addi %13, %227 : vector<1x256xi32>
    %c16_i32_82 = arith.constant 16 : i32
    %229 = vector.broadcast %c16_i32_82 : i32 to vector<1x256xi32>
    %230 = arith.cmpi slt, %228, %229 : vector<1x256xi32>
    %231 = arith.andi %226, %230 : vector<1x256xi1>
    %cst_83 = arith.constant -3.40282347E+38 : f32
    %232 = vector.shape_cast %231 : vector<1x256xi1> to vector<1x256xi1>
    %233 = vector.broadcast %232 : vector<1x256xi1> to vector<4x256xi1>
    %234 = vector.broadcast %cst_83 : f32 to vector<4x256xf32>
    %235 = arith.select %233, %216, %234 : vector<4x256xi1>, vector<4x256xf32>
    %c240_i32_84 = arith.constant 240 : i32
    %236 = tpu.dynamic_rotate %215 by %c240_i32_84 dim 1 : vector<4x256xf32>, i32 -> vector<4x256xf32>
    %c-16_i32_85 = arith.constant -16 : i32
    %237 = vector.broadcast %c-16_i32_85 : i32 to vector<1x256xi32>
    %238 = arith.cmpi sge, %11, %237 : vector<1x256xi32>
    %c240_i32_86 = arith.constant 240 : i32
    %239 = vector.broadcast %c240_i32_86 : i32 to vector<1x256xi32>
    %240 = arith.cmpi slt, %11, %239 : vector<1x256xi32>
    %241 = arith.andi %238, %240 : vector<1x256xi1>
    %c0_i32_87 = arith.constant 0 : i32
    %242 = vector.broadcast %c0_i32_87 : i32 to vector<1x256xi32>
    %243 = arith.addi %13, %242 : vector<1x256xi32>
    %c0_i32_88 = arith.constant 0 : i32
    %244 = vector.broadcast %c0_i32_88 : i32 to vector<1x256xi32>
    %245 = arith.cmpi sge, %243, %244 : vector<1x256xi32>
    %246 = arith.andi %241, %245 : vector<1x256xi1>
    %c0_i32_89 = arith.constant 0 : i32
    %247 = vector.broadcast %c0_i32_89 : i32 to vector<1x256xi32>
    %248 = arith.addi %13, %247 : vector<1x256xi32>
    %c16_i32_90 = arith.constant 16 : i32
    %249 = vector.broadcast %c16_i32_90 : i32 to vector<1x256xi32>
    %250 = arith.cmpi slt, %248, %249 : vector<1x256xi32>
    %251 = arith.andi %246, %250 : vector<1x256xi1>
    %cst_91 = arith.constant -3.40282347E+38 : f32
    %252 = vector.shape_cast %251 : vector<1x256xi1> to vector<1x256xi1>
    %253 = vector.broadcast %252 : vector<1x256xi1> to vector<4x256xi1>
    %254 = vector.broadcast %cst_91 : f32 to vector<4x256xf32>
    %255 = arith.select %253, %236, %254 : vector<4x256xi1>, vector<4x256xf32>
    %256 = arith.maximumf %235, %255 : vector<4x256xf32>
    %257 = arith.maximumf %215, %256 : vector<4x256xf32>
    %258 = tpu.concatenate %33, %53, %73, %93, %10, %113, %133, %153, %173, %257 in 0 : vector<12x256xf32>, vector<12x256xf32>, vector<12x256xf32>, vector<12x256xf32>, vector<12x256xf32>, vector<12x256xf32>, vector<12x256xf32>, vector<12x256xf32>, vector<12x256xf32>, vector<4x256xf32> -> vector<112x256xf32>
    %c0_92 = arith.constant 0 : index
    %c0_93 = arith.constant 0 : index
    %259 = vector.load %arg3[%c0_92, %c0_93] : memref<32x112xf32, #tpu.memory_space<vmem>>, vector<32x112xf32>
    %cst_94 = arith.constant dense<0.000000e+00> : vector<32x256xf32>
    %260 = tpu.matmul %259, %258, %cst_94 {dimension_numbers = #tpu.dot_dimension_numbers<[1], [0], [0], [1], [0, 0, 1, 1], [], []>} : vector<32x112xf32>, vector<112x256xf32>, vector<32x256xf32> -> vector<32x256xf32>
    %cst_95 = arith.constant 0.000000e+00 : f32
    %261 = vector.broadcast %cst_95 : f32 to vector<32x256xf32>
    %262 = arith.maximumf %260, %261 : vector<32x256xf32>
    %c0_96 = arith.constant 0 : index
    %c8 = arith.constant 8 : index
    %c0_97 = arith.constant 0 : index
    %263 = vector.load %arg4[%c0_96, %c8, %c0_97] : memref<1x40x256xf32, #tpu.memory_space<vmem>>, vector<1x32x256xf32>
    %264 = vector.shape_cast %263 : vector<1x32x256xf32> to vector<32x256xf32>
    %265 = vector.shape_cast %262 : vector<32x256xf32> to vector<1x32x256xf32>
    tpu.vector_store %arg4[%c0_96, %c8, %c0_97], %265 {strides = array<i32>} : memref<1x40x256xf32, #tpu.memory_space<vmem>>, vector<1x32x256xf32>,
    return
  }
  func.func @transform_0(%arg0: i32) -> (i32, i32, i32) {
    %c0_i32 = arith.constant 0 : i32
    %c0_i32_0 = arith.constant 0 : i32
    %c0_i32_1 = arith.constant 0 : i32
    return %arg0, %c0_i32, %c0_i32_0 : i32, i32, i32
  }
  func.func @transform_1(%arg0: i32) -> (i32, i32) {
    %c0_i32 = arith.constant 0 : i32
    %c0_i32_0 = arith.constant 0 : i32
    %c0_i32_1 = arith.constant 0 : i32
    return %c0_i32, %c0_i32_0 : i32, i32
  }
  func.func @transform_2(%arg0: i32) -> (i32, i32) {
    %c0_i32 = arith.constant 0 : i32
    %c0_i32_0 = arith.constant 0 : i32
    %c0_i32_1 = arith.constant 0 : i32
    return %c0_i32, %c0_i32_0 : i32, i32
  }
  func.func @transform_3(%arg0: i32) -> (i32, i32, i32) {
    %c0_i32 = arith.constant 0 : i32
    %c0_i32_0 = arith.constant 0 : i32
    %c0_i32_1 = arith.constant 0 : i32
    return %arg0, %c0_i32, %c0_i32_0 : i32, i32, i32
  }
}

</mosaic_0001>

<llo_original>
// kernel: inception_forward.1
$region0: #{inception_forward.1}
  #allocation0 [shape = 'u32[]', space=smem, size = 0x4, offset = 0x4, fixed_abs, tag = 'smem constant byte address 0x4 - core index']
  #allocation1 [shape = 'u32[72,128]{1,0:T(1,128)}', space=vmem, size = 0x9000, scoped, tag = 'internal scratch']
  %s0 = inlined_call_operand.vmem [shape: f32[2,4,256], index: 0, kind: input, shape index: {}]
  %s1 = inlined_call_operand.vmem [shape: f32[20,4], index: 1, kind: input, shape index: {}]
  %s2 = inlined_call_operand.vmem [shape: f32[32,112], index: 2, kind: input, shape index: {}]
  %s3 = inlined_call_operand.vmem [shape: f32[2,40,256], index: 3, kind: output, shape index: {}]
  %s4 = sld [smem:[#allocation0]]
  $region45: #{inception_forward.1} parent=0
    _
  %s6 = ssub.s32 1, %s4
  %s7 = scalar_select 0, %s6, %s4
  loop: start=0, step=1, limit=4
  $region2: #{inception_forward.1} parent=0 // loop_pre_header
    _
  $region3: #{inception_forward.1} parent=0 // loop_header
    %s9 = sphi 0, %s13
    %p10 = scmp.ge.s32.totalorder %s9, 4
    %s19 = sphi 0, %s21
    %s22 = sphi 0, %s19
    %s23 = sphi 0, %s22
    %s39 = sphi 0, %s23
    %s43 = sphi 0, %s43
    %s45 = sphi 0, %s43
    %s46 = sphi 0, %s45
    %s60 = sphi 0, %s46
    %s64 = sphi 0, %s64
    %s66 = sphi 0, %s64
    %s67 = sphi 0, %s66
    %s81 = sphi 0, %s67
    %s87 = sphi 0, %s89
    %s90 = sphi 0, %s87
    %s91 = sphi 0, %s90
    %s107 = sphi 0, %s91
  $region4: #{inception_forward.1} parent=0 // loop_header_branch
    %12 = sbr.rel (%p10) target = $region8
  $region5: #{inception_forward.1} parent=0 // loop_body
    %s14 = ssub.s32 %s9, 1
    %s15 = ssub.s32 %s9, 2
    %s16 = sadd.s32 %s9, 1
    %s17 = ssub.s32 %s9, %s16
    %p18 = scmp.eq.s32.totalorder %s17, 0
    %s20 = sadd.s32 %s19, 1
    %s21 = scalar_select %p18, %s19, %s20
    %p24 = pneg %p18
    %p25 = scmp.eq.s32.totalorder %s9, 1
    %p26 = por %p24, %p25
    %p27 = scmp.ne.s32.totalorder %s19, %s22
    %p28 = scmp.eq.s32.totalorder %s9, 0
    %p29 = por %p27, %p28
    %p30 = scmp.ne.s32.totalorder %s19, %s22
    %p31 = scmp.eq.s32.totalorder %s14, 1
    %p32 = por %p30, %p31
    %p33 = scmp.ne.s32.totalorder %s22, %s23
    %p34 = scmp.eq.s32.totalorder %s14, 0
    %p35 = por %p33, %p34
    %p36 = scmp.ne.s32.totalorder %s22, %s23
    %p37 = scmp.eq.s32.totalorder %s15, 1
    %p38 = por %p36, %p37
    %p40 = scmp.ne.s32.totalorder %s23, %s39
    %p41 = scmp.eq.s32.totalorder %s15, 0
    %p42 = por %p40, %p41
    %s44 = sadd.s32 %s43, 1
    %p47 = scmp.eq.s32.totalorder %s9, 1
    %p48 = scmp.ne.s32.totalorder %s43, %s45
    %p49 = scmp.eq.s32.totalorder %s9, 0
    %p50 = por %p48, %p49
    %p51 = scmp.ne.s32.totalorder %s43, %s45
    %p52 = scmp.eq.s32.totalorder %s14, 1
    %p53 = por %p51, %p52
    %p54 = scmp.ne.s32.totalorder %s45, %s46
    %p55 = scmp.eq.s32.totalorder %s14, 0
    %p56 = por %p54, %p55
    %p57 = scmp.ne.s32.totalorder %s45, %s46
    %p58 = scmp.eq.s32.totalorder %s15, 1
    %p59 = por %p57, %p58
    %p61 = scmp.ne.s32.totalorder %s46, %s60
    %p62 = scmp.eq.s32.totalorder %s15, 0
    %p63 = por %p61, %p62
    %s65 = sadd.s32 %s64, 1
    %p68 = scmp.eq.s32.totalorder %s9, 1
    %p69 = scmp.ne.s32.totalorder %s64, %s66
    %p70 = scmp.eq.s32.totalorder %s9, 0
    %p71 = por %p69, %p70
    %p72 = scmp.ne.s32.totalorder %s64, %s66
    %p73 = scmp.eq.s32.totalorder %s14, 1
    %p74 = por %p72, %p73
    %p75 = scmp.ne.s32.totalorder %s66, %s67
    %p76 = scmp.eq.s32.totalorder %s14, 0
    %p77 = por %p75, %p76
    %p78 = scmp.ne.s32.totalorder %s66, %s67
    %p79 = scmp.eq.s32.totalorder %s15, 1
    %p80 = por %p78, %p79
    %p82 = scmp.ne.s32.totalorder %s67, %s81
    %p83 = scmp.eq.s32.totalorder %s15, 0
    %p84 = por %p82, %p83
    %s85 = ssub.s32 %s9, %s16
    %p86 = scmp.eq.s32.totalorder %s85, 0
    %s88 = sadd.s32 %s87, 1
    %s89 = scalar_select %p86, %s87, %s88
    %p92 = pneg %p86
    %p93 = scmp.eq.s32.totalorder %s9, 1
    %p94 = por %p92, %p93
    %p95 = scmp.ne.s32.totalorder %s87, %s90
    %p96 = scmp.eq.s32.totalorder %s9, 0
    %p97 = por %p95, %p96
    %p98 = scmp.ne.s32.totalorder %s87, %s90
    %p99 = scmp.eq.s32.totalorder %s14, 1
    %p100 = por %p98, %p99
    %p101 = scmp.ne.s32.totalorder %s90, %s91
    %p102 = scmp.eq.s32.totalorder %s14, 0
    %p103 = por %p101, %p102
    %p104 = scmp.ne.s32.totalorder %s90, %s91
    %p105 = scmp.eq.s32.totalorder %s15, 1
    %p106 = por %p104, %p105
    %p108 = scmp.ne.s32.totalorder %s91, %s107
    %p109 = scmp.eq.s32.totalorder %s15, 0
    %p110 = por %p108, %p109
    %p111 = scmp.le.s32.totalorder 1, %s9
    %p112 = scmp.lt.s32.totalorder %s9, 3
    %p113 = pnand %p111, %p112
    %p114 = pneg %p113
    // Predicated region
    $region9: #{inception_forward.1} parent=5 // pred_check
      _
    $region10: #{inception_forward.1} parent=5 // pred_check_branch
      %116 = sbr.rel (%p113) target = $region12
    $region11: #{inception_forward.1} parent=5 // pred_region
      %s117 = ssub.s32 %s9, 1
      // Predicated region
      $region13: #{inception_forward.1} parent=11 // pred_check
        %p118 = pneg %p56
      $region14: #{inception_forward.1} parent=11 // pred_check_branch
        %120 = sbr.rel (%p118) target = $region16
      $region15: #{inception_forward.1} parent=11 // pred_region
        _
      $region16: #{inception_forward.1} parent=11 // pred_fallthru
        _
      // Predicated region
      $region17: #{inception_forward.1} parent=11 // pred_check
        %p121 = pneg %p77
      $region18: #{inception_forward.1} parent=11 // pred_check_branch
        %123 = sbr.rel (%p121) target = $region20
      $region19: #{inception_forward.1} parent=11 // pred_region
        _
      $region20: #{inception_forward.1} parent=11 // pred_fallthru
        _
    $region12: #{inception_forward.1} parent=5 // pred_fallthru
      _
    %p124 = scmp.lt.s32.totalorder %s9, 2
    // Predicated region
    $region21: #{inception_forward.1} parent=5 // pred_check
      %p125 = pneg %p124
    $region22: #{inception_forward.1} parent=5 // pred_check_branch
      %127 = sbr.rel (%p125) target = $region24
    $region23: #{inception_forward.1} parent=5 // pred_region
      // Predicated region
      $region25: #{inception_forward.1} parent=23 // pred_check
        %p128 = pneg %p29
      $region26: #{inception_forward.1} parent=23 // pred_check_branch
        %130 = sbr.rel (%p128) target = $region28
      $region27: #{inception_forward.1} parent=23 // pred_region
        %p131 = scmp.lt.s32.totalorder %s9, 1
        %s132 = scalar_select %p131, %s9, 1
        %s133 = smul.addr %s132, 2
        %s134 = smul.addr %s133, 4
        %s135 = scalar_lea.vmem %s0, %s134
      $region28: #{inception_forward.1} parent=23 // pred_fallthru
        _
    $region24: #{inception_forward.1} parent=5 // pred_fallthru
      _
    %p136 = scmp.le.s32.totalorder 1, %s9
    %p137 = scmp.lt.s32.totalorder %s9, 3
    %p138 = pnand %p136, %p137
    %p139 = pneg %p138
    // Predicated region
    $region29: #{inception_forward.1} parent=5 // pred_check
      _
    $region30: #{inception_forward.1} parent=5 // pred_check_branch
      %141 = sbr.rel (%p138) target = $region32
    $region31: #{inception_forward.1} parent=5 // pred_region
      %s142 = ssub.s32 %s9, 1
      %p143 = scmp.lt.s32.totalorder %s14, 1
      %s144 = scalar_select %p143, %s14, 1
      %s145 = smul.addr %s144, 2
      %s146 = smul.addr %s145, 4
      %s147 = scalar_lea.vmem %s0, %s146
      %p148 = pneg %p35
      %p149 = pneg %p32
      %p150 = pneg %p56
      %p151 = pneg %p53
      %p152 = pneg %p77
      %p153 = pneg %p74
      %p154 = pneg %p103
      %p155 = pneg %p100
      %p156 = scmp.lt.s32.totalorder %s14, 1
      %s157 = scalar_select %p156, %s14, 1
      %s158 = smul.addr %s157, 10
      %s159 = smul.addr %s158, 8
      %s160 = scalar_lea.vmem %s3, %s159
      %p161 = scmp.lt.s32.totalorder %s14, 1
      %s162 = scalar_select %p161, %s14, 1
      %s163 = smul.addr %s162, 2
      %s164 = smul.addr %s163, 4
      %s165 = scalar_lea.vmem %s0, %s164
      %p166 = scmp.lt.s32.totalorder %s14, 1
      %s167 = scalar_select %p166, %s14, 1
      %s168 = smul.addr %s167, 10
      %s169 = smul.addr %s168, 8
      %s170 = scalar_lea.vmem %s3, %s169
      %v171 = vld [vmem:[%s165] sm:$0xff]
      %v172 = vld [vmem:[%s1] sm:$0xff]
      %v173 = vld [vmem:[%s1 + $0x8] sm:$0xff]
      %v174 = vld [vmem:[%s1 + $0x10] sm:$0xf]
      %176 = vst [vmem:[#allocation1] ss:$2 sm:$0xff] %v171
      %v177 = vld.sshfl [vmem:[#allocation1] sm:$0xff pattern:$0x75316420]
      %v178 = vld.sshfl [vmem:[#allocation1 + $0x8] sm:$0xff pattern:$0x75316420]
      %vm179 = vcmask 31744
      %v181 = vsel %vm179, %v172, 0
      %v184 = vsel %vm179, %v173, 0
      %v187 = vsel %vm179, %v174, 0
      %vm189 = vcmask 1043456
      %v190 = vsel %vm189, %v177, 0
      %v192 = vsel %vm189, %v178, 0
      %194 = vmatpush.msra.mxu0 0.0
      %195 = vmatpush.msra.mxu0 0.0
      %196 = vmatpush.msra.mxu0 0.0
      %197 = vmatpush.msra.mxu0 0.0
      %198 = vmatpush.msra.mxu0 0.0
      %199 = vmatpush.msra.mxu0 0.0
      %200 = vmatpush.msra.mxu0 0.0
      %201 = vmatpush.msra.mxu0 0.0
      %202 = vmatpush.msra.mxu0 0.0
      %203 = vmatpush.msra.mxu0 0.0
      %204 = vmatpush.msra.mxu0 0.0
      %205 = vmatpush.msra.mxu0 0.0
      %206 = vmatpush.msra.mxu0 0.0
      %207 = vmatpush.msra.mxu0 0.0
      %208 = vmatpush.msra.mxu0 0.0
      %209 = vmatpush.msra.mxu0 %v190
      %210 = vmatmul.f32.gmra.mxu0 %v181
      %v211 = vpop.f32.mrf.mxu0
      %v212 = vadd.f32 0.0, %v211
      %213 = vmatmul.f32.gmra.mxu0 %v184
      %v214 = vpop.f32.mrf.mxu0
      %v215 = vadd.f32 0.0, %v214
      %216 = vmatmul.f32.gmra.mxu0 %v187
      %v217 = vpop.f32.mrf.mxu0
      %v218 = vadd.f32 0.0, %v217
      %219 = vdwg.mxu0
      %220 = vmatpush.msra.mxu0 0.0
      %221 = vmatpush.msra.mxu0 0.0
      %222 = vmatpush.msra.mxu0 0.0
      %223 = vmatpush.msra.mxu0 0.0
      %224 = vmatpush.msra.mxu0 0.0
      %225 = vmatpush.msra.mxu0 0.0
      %226 = vmatpush.msra.mxu0 0.0
      %227 = vmatpush.msra.mxu0 0.0
      %228 = vmatpush.msra.mxu0 0.0
      %229 = vmatpush.msra.mxu0 0.0
      %230 = vmatpush.msra.mxu0 0.0
      %231 = vmatpush.msra.mxu0 0.0
      %232 = vmatpush.msra.mxu0 0.0
      %233 = vmatpush.msra.mxu0 0.0
      %234 = vmatpush.msra.mxu0 0.0
      %235 = vmatpush.msra.mxu0 %v192
      %236 = vmatmul.f32.gmra.mxu0 %v181
      %v237 = vpop.f32.mrf.mxu0
      %v238 = vadd.f32 0.0, %v237
      %239 = vmatmul.f32.gmra.mxu0 %v184
      %v240 = vpop.f32.mrf.mxu0
      %v241 = vadd.f32 0.0, %v240
      %242 = vmatmul.f32.gmra.mxu0 %v187
      %v243 = vpop.f32.mrf.mxu0
      %v244 = vadd.f32 0.0, %v243
      %245 = vdwg.mxu0
      %v246 = vmax.f32 %v212, 0.0
      %v247 = vmax.f32 %v238, 0.0
      %v248 = vmax.f32 %v215, 0.0
      %v249 = vmax.f32 %v241, 0.0
      %v250 = vmax.f32 %v218, 0.0
      %v251 = vmax.f32 %v244, 0.0
      %252 = vst [vmem:[%s170] sm:$0xff] %v246
      %253 = vst [vmem:[%s170 + $0x8] sm:$0xff] %v247
      %v254 = vlaneseq
      %v255 = vand.u32 %v254, 127
      %v256 = vadd.s32 %v255, 128
      %v257 = vand.u32 %v255, 15
      %v258 = vand.u32 %v256, 15
      %259 = vrot.lane.b32.xlu0 %v248, 17
      %v260 = vpop.permute.xlu0 %259
      %261 = vrot.lane.b32.xlu0 %v250, 17
      %v262 = vpop.permute.xlu0 %261
      %263 = vrot.lane.b32.xlu0 %v249, 17
      %v264 = vpop.permute.xlu0 %263
      %265 = vrot.lane.b32.xlu0 %v251, 17
      %v266 = vpop.permute.xlu0 %265
      %vm267 = vcmp.lt.s32.totalorder %v255, 17
      %v268 = vsel %vm267, %v260, %v264
      %v269 = vsel %vm267, %v262, %v266
      %v270 = vsel %vm267, %v264, %v260
      %v271 = vsel %vm267, %v266, %v262
      %vm272 = vcmp.ge.s32.totalorder %v255, 16
      %vm273 = vcmp.ge.s32.totalorder %v256, 16
      %vm274 = vcmp.lt.s32.totalorder %v255, 272
      %vm275 = vcmp.lt.s32.totalorder %v256, 272
      %vm276 = vmand %vm272, %vm274
      %vm277 = vmand %vm273, %vm275
      %v278 = vadd.s32 %v257, 4294967295
      %v279 = vadd.s32 %v258, 4294967295
      %vm280 = vcmp.ge.s32.totalorder %v278, 0
      %vm281 = vcmp.ge.s32.totalorder %v279, 0
      %vm282 = vmand %vm276, %vm280
      %vm283 = vmand %vm277, %vm281
      %vm284 = vcmp.lt.s32.totalorder %v278, 16
      %vm285 = vcmp.lt.s32.totalorder %v279, 16
      %vm286 = vmand %vm282, %vm284
      %vm287 = vmand %vm283, %vm285
      %v288 = vsel %vm286, 1, 0
      %v289 = vsel %vm287, 1, 0
      %vm290 = vcmp.eq.s32.totalorder %v288, 1
      %vm291 = vcmp.eq.s32.totalorder %v289, 1
      %v292 = vsel %vm290, %v270, 0.0
      %v293 = vsel %vm291, %v268, 0.0
      %v294 = vsel %vm290, %v271, 0.0
      %v295 = vsel %vm291, %v269, 0.0
      %296 = vrot.lane.b32.xlu0 %v248, 16
      %v297 = vpop.permute.xlu0 %296
      %298 = vrot.lane.b32.xlu0 %v250, 16
      %v299 = vpop.permute.xlu0 %298
      %300 = vrot.lane.b32.xlu0 %v249, 16
      %v301 = vpop.permute.xlu0 %300
      %302 = vrot.lane.b32.xlu0 %v251, 16
      %v303 = vpop.permute.xlu0 %302
      %vm304 = vcmp.lt.s32.totalorder %v255, 16
      %v305 = vsel %vm304, %v297, %v301
      %v306 = vsel %vm304, %v299, %v303
      %v307 = vsel %vm304, %v301, %v297
      %v308 = vsel %vm304, %v303, %v299
      %vm309 = vcmp.ge.s32.totalorder %v257, 0
      %vm310 = vcmp.ge.s32.totalorder %v258, 0
      %vm311 = vmand %vm276, %vm309
      %vm312 = vmand %vm277, %vm310
      %vm313 = vcmp.lt.s32.totalorder %v257, 16
      %vm314 = vcmp.lt.s32.totalorder %v258, 16
      %vm315 = vmand %vm311, %vm313
      %vm316 = vmand %vm312, %vm314
      %v317 = vsel %vm315, 1, 0
      %v318 = vsel %vm316, 1, 0
      %vm319 = vcmp.eq.s32.totalorder %v317, 1
      %vm320 = vcmp.eq.s32.totalorder %v318, 1
      %v321 = vsel %vm319, %v307, 0.0
      %v322 = vsel %vm320, %v305, 0.0
      %v323 = vsel %vm319, %v308, 0.0
      %v324 = vsel %vm320, %v306, 0.0
      %325 = vrot.lane.b32.xlu0 %v248, 15
      %v326 = vpop.permute.xlu0 %325
      %327 = vrot.lane.b32.xlu0 %v250, 15
      %v328 = vpop.permute.xlu0 %327
      %329 = vrot.lane.b32.xlu0 %v249, 15
      %v330 = vpop.permute.xlu0 %329
      %331 = vrot.lane.b32.xlu0 %v251, 15
      %v332 = vpop.permute.xlu0 %331
      %vm333 = vcmp.lt.s32.totalorder %v255, 15
      %v334 = vsel %vm333, %v326, %v330
      %v335 = vsel %vm333, %v328, %v332
      %v336 = vsel %vm333, %v330, %v326
      %v337 = vsel %vm333, %v332, %v328
      %v338 = vadd.s32 %v257, 1
      %v339 = vadd.s32 %v258, 1
      %vm340 = vcmp.ge.s32.totalorder %v338, 0
      %vm341 = vcmp.ge.s32.totalorder %v339, 0
      %vm342 = vmand %vm276, %vm340
      %vm343 = vmand %vm277, %vm341
      %vm344 = vcmp.lt.s32.totalorder %v338, 16
      %vm345 = vcmp.lt.s32.totalorder %v339, 16
      %vm346 = vmand %vm342, %vm344
      %vm347 = vmand %vm343, %vm345
      %v348 = vsel %vm346, 1, 0
      %v349 = vsel %vm347, 1, 0
      %vm350 = vcmp.eq.s32.totalorder %v348, 1
      %vm351 = vcmp.eq.s32.totalorder %v349, 1
      %v352 = vsel %vm350, %v336, 0.0
      %v353 = vsel %vm351, %v334, 0.0
      %v354 = vsel %vm350, %v337, 0.0
      %v355 = vsel %vm351, %v335, 0.0
      %356 = vrot.lane.b32.xlu0 %v248, 1
      %v357 = vpop.permute.xlu0 %356
      %358 = vrot.lane.b32.xlu0 %v250, 1
      %v359 = vpop.permute.xlu0 %358
      %360 = vrot.lane.b32.xlu0 %v249, 1
      %v361 = vpop.permute.xlu0 %360
      %362 = vrot.lane.b32.xlu0 %v251, 1
      %v363 = vpop.permute.xlu0 %362
      %vm364 = vcmp.lt.s32.totalorder %v255, 1
      %v365 = vsel %vm364, %v357, %v361
      %v366 = vsel %vm364, %v359, %v363
      %v367 = vsel %vm364, %v361, %v357
      %v368 = vsel %vm364, %v363, %v359
      %vm369 = vcmp.ge.s32.totalorder %v255, 0
      %vm370 = vcmp.ge.s32.totalorder %v256, 0
      %vm371 = vcmp.lt.s32.totalorder %v255, 256
      %vm372 = vcmp.lt.s32.totalorder %v256, 256
      %vm373 = vmand %vm369, %vm371
      %vm374 = vmand %vm370, %vm372
      %vm375 = vmand %vm373, %vm280
      %vm376 = vmand %vm374, %vm281
      %vm377 = vmand %vm375, %vm284
      %vm378 = vmand %vm376, %vm285
      %v379 = vsel %vm377, 1, 0
      %v380 = vsel %vm378, 1, 0
      %vm381 = vcmp.eq.s32.totalorder %v379, 1
      %vm382 = vcmp.eq.s32.totalorder %v380, 1
      %v383 = vsel %vm381, %v367, 0.0
      %v384 = vsel %vm382, %v365, 0.0
      %v385 = vsel %vm381, %v368, 0.0
      %v386 = vsel %vm382, %v366, 0.0
      %387 = vrot.lane.b32.xlu0 %v248, 127
      %v388 = vpop.permute.xlu0 %387
      %389 = vrot.lane.b32.xlu0 %v250, 127
      %v390 = vpop.permute.xlu0 %389
      %391 = vrot.lane.b32.xlu0 %v249, 127
      %v392 = vpop.permute.xlu0 %391
      %393 = vrot.lane.b32.xlu0 %v251, 127
      %v394 = vpop.permute.xlu0 %393
      %vm395 = vcmp.lt.s32.totalorder %v255, 127
      %v396 = vsel %vm395, %v388, %v392
      %v397 = vsel %vm395, %v390, %v394
      %v398 = vsel %vm395, %v392, %v388
      %v399 = vsel %vm395, %v394, %v390
      %vm400 = vmand %vm373, %vm340
      %vm401 = vmand %vm374, %vm341
      %vm402 = vmand %vm400, %vm344
      %vm403 = vmand %vm401, %vm345
      %v404 = vsel %vm402, 1, 0
      %v405 = vsel %vm403, 1, 0
      %vm406 = vcmp.eq.s32.totalorder %v404, 1
      %vm407 = vcmp.eq.s32.totalorder %v405, 1
      %v408 = vsel %vm406, %v396, 0.0
      %v409 = vsel %vm407, %v398, 0.0
      %v410 = vsel %vm406, %v397, 0.0
      %v411 = vsel %vm407, %v399, 0.0
      %412 = vrot.lane.b32.xlu0 %v248, 113
      %v413 = vpop.permute.xlu0 %412
      %414 = vrot.lane.b32.xlu0 %v250, 113
      %v415 = vpop.permute.xlu0 %414
      %416 = vrot.lane.b32.xlu0 %v249, 113
      %v417 = vpop.permute.xlu0 %416
      %418 = vrot.lane.b32.xlu0 %v251, 113
      %v419 = vpop.permute.xlu0 %418
      %vm420 = vcmp.lt.s32.totalorder %v255, 113
      %v421 = vsel %vm420, %v413, %v417
      %v422 = vsel %vm420, %v415, %v419
      %v423 = vsel %vm420, %v417, %v413
      %v424 = vsel %vm420, %v419, %v415
      %vm425 = vcmp.ge.s32.totalorder %v255, 4294967280
      %vm426 = vcmp.ge.s32.totalorder %v256, 4294967280
      %vm427 = vcmp.lt.s32.totalorder %v255, 240
      %vm428 = vcmp.lt.s32.totalorder %v256, 240
      %vm429 = vmand %vm425, %vm427
      %vm430 = vmand %vm426, %vm428
      %vm431 = vmand %vm429, %vm280
      %vm432 = vmand %vm430, %vm281
      %vm433 = vmand %vm431, %vm284
      %vm434 = vmand %vm432, %vm285
      %v435 = vsel %vm433, 1, 0
      %v436 = vsel %vm434, 1, 0
      %vm437 = vcmp.eq.s32.totalorder %v435, 1
      %vm438 = vcmp.eq.s32.totalorder %v436, 1
      %v439 = vsel %vm437, %v421, 0.0
      %v440 = vsel %vm438, %v423, 0.0
      %v441 = vsel %vm437, %v422, 0.0
      %v442 = vsel %vm438, %v424, 0.0
      %443 = vrot.lane.b32.xlu0 %v248, 112
      %v444 = vpop.permute.xlu0 %443
      %445 = vrot.lane.b32.xlu0 %v250, 112
      %v446 = vpop.permute.xlu0 %445
      %447 = vrot.lane.b32.xlu0 %v249, 112
      %v448 = vpop.permute.xlu0 %447
      %449 = vrot.lane.b32.xlu0 %v251, 112
      %v450 = vpop.permute.xlu0 %449
      %vm451 = vcmp.lt.s32.totalorder %v255, 112
      %v452 = vsel %vm451, %v444, %v448
      %v453 = vsel %vm451, %v446, %v450
      %v454 = vsel %vm451, %v448, %v444
      %v455 = vsel %vm451, %v450, %v446
      %vm456 = vmand %vm429, %vm309
      %vm457 = vmand %vm430, %vm310
      %vm458 = vmand %vm456, %vm313
      %vm459 = vmand %vm457, %vm314
      %v460 = vsel %vm458, 1, 0
      %v461 = vsel %vm459, 1, 0
      %vm462 = vcmp.eq.s32.totalorder %v460, 1
      %vm463 = vcmp.eq.s32.totalorder %v461, 1
      %v464 = vsel %vm462, %v452, 0.0
      %v465 = vsel %vm463, %v454, 0.0
      %v466 = vsel %vm462, %v453, 0.0
      %v467 = vsel %vm463, %v455, 0.0
      %468 = vrot.lane.b32.xlu0 %v248, 111
      %v469 = vpop.permute.xlu0 %468
      %470 = vrot.lane.b32.xlu0 %v250, 111
      %v471 = vpop.permute.xlu0 %470
      %472 = vrot.lane.b32.xlu0 %v249, 111
      %v473 = vpop.permute.xlu0 %472
      %474 = vrot.lane.b32.xlu0 %v251, 111
      %v475 = vpop.permute.xlu0 %474
      %vm476 = vcmp.lt.s32.totalorder %v255, 111
      %v477 = vsel %vm476, %v469, %v473
      %v478 = vsel %vm476, %v471, %v475
      %v479 = vsel %vm476, %v473, %v469
      %v480 = vsel %vm476, %v475, %v471
      %vm481 = vmand %vm429, %vm340
      %vm482 = vmand %vm430, %vm341
      %vm483 = vmand %vm481, %vm344
      %vm484 = vmand %vm482, %vm345
      %v485 = vsel %vm483, 1, 0
      %v486 = vsel %vm484, 1, 0
      %vm487 = vcmp.eq.s32.totalorder %v485, 1
      %vm488 = vcmp.eq.s32.totalorder %v486, 1
      %v489 = vsel %vm487, %v477, 0.0
      %v490 = vsel %vm488, %v479, 0.0
      %v491 = vsel %vm487, %v478, 0.0
      %v492 = vsel %vm488, %v480, 0.0
      %493 = vst [vmem:[#allocation1] ss:$2 sm:$0xff] %v171
      %v494 = vld.sshfl [vmem:[#allocation1] sm:$0xff pattern:$0x75316420]
      %v495 = vld.sshfl [vmem:[#allocation1 + $0x8] sm:$0xff pattern:$0x75316420]
      %498 = vrot.lane.b32.xlu0 %v494, 1
      %v499 = vpop.permute.xlu0 %498
      %500 = vrot.lane.b32.xlu0 %v495, 1
      %v501 = vpop.permute.xlu0 %500
      %v502 = vsel %vm364, %v499, %v501
      %v503 = vsel %vm364, %v501, %v499
      %v504 = vsel %vm381, %v503, -3.4028235e+38
      %v505 = vsel %vm382, %v502, -3.4028235e+38
      %506 = vst [vmem:[#allocation1] ss:$2 sm:$0xff] %v171
      %v507 = vld.sshfl [vmem:[#allocation1] sm:$0xff pattern:$0x75316420]
      %v508 = vld.sshfl [vmem:[#allocation1 + $0x8] sm:$0xff pattern:$0x75316420]
      %511 = vrot.lane.b32.xlu0 %v507, 127
      %v512 = vpop.permute.xlu0 %511
      %513 = vrot.lane.b32.xlu0 %v508, 127
      %v514 = vpop.permute.xlu0 %513
      %v515 = vsel %vm395, %v512, %v514
      %v516 = vsel %vm395, %v514, %v512
      %v517 = vsel %vm406, %v515, -3.4028235e+38
      %v518 = vsel %vm407, %v516, -3.4028235e+38
      %v519 = vmax.f32 %v504, %v517
      %v520 = vmax.f32 %v505, %v518
      %v523 = vrot.slane %v520, 4
      %v524 = vsel %vm189, %v519, %v523
      %v526 = vmax.f32 %v171, %v524
      %528 = vst [vmem:[#allocation1] ss:$2 sm:$0xff] %v526
      %v529 = vld.sshfl [vmem:[#allocation1] sm:$0xff pattern:$0x75316420]
      %v530 = vld.sshfl [vmem:[#allocation1 + $0x8] sm:$0xff pattern:$0x75316420]
      %533 = vrot.lane.b32.xlu0 %v529, 16
      %v534 = vpop.permute.xlu0 %533
      %535 = vrot.lane.b32.xlu0 %v530, 16
      %v536 = vpop.permute.xlu0 %535
      %v537 = vsel %vm304, %v534, %v536
      %v538 = vsel %vm304, %v536, %v534
      %v539 = vsel %vm319, %v538, -3.4028235e+38
      %v540 = vsel %vm320, %v537, -3.4028235e+38
      %541 = vst [vmem:[#allocation1] ss:$2 sm:$0xff] %v526
      %v542 = vld.sshfl [vmem:[#allocation1] sm:$0xff pattern:$0x75316420]
      %v543 = vld.sshfl [vmem:[#allocation1 + $0x8] sm:$0xff pattern:$0x75316420]
      %546 = vrot.lane.b32.xlu0 %v542, 112
      %v547 = vpop.permute.xlu0 %546
      %548 = vrot.lane.b32.xlu0 %v543, 112
      %v549 = vpop.permute.xlu0 %548
      %v550 = vsel %vm451, %v547, %v549
      %v551 = vsel %vm451, %v549, %v547
      %v552 = vsel %vm462, %v550, -3.4028235e+38
      %v553 = vsel %vm463, %v551, -3.4028235e+38
      %v554 = vmax.f32 %v539, %v552
      %v555 = vmax.f32 %v540, %v553
      %v558 = vrot.slane %v555, 4
      %v559 = vsel %vm189, %v554, %v558
      %v561 = vmax.f32 %v526, %v559
      %v566 = vrot.slane %v321, 4
      %v567 = vrot.slane %v322, 4
      %v568 = vrot.slane %v323, 4
      %v569 = vsel %vm189, %v566, %v568
      %v570 = vrot.slane %v324, 4
      %v571 = vsel %vm189, %v567, %v570
      %v580 = vrot.slane %v383, 4
      %v581 = vrot.slane %v384, 4
      %v582 = vrot.slane %v385, 4
      %v583 = vsel %vm189, %v580, %v582
      %v584 = vrot.slane %v386, 4
      %v585 = vsel %vm189, %v581, %v584
      %v594 = vrot.slane %v408, 4
      %v595 = vrot.slane %v409, 4
      %v596 = vrot.slane %v410, 4
      %v597 = vsel %vm189, %v594, %v596
      %v598 = vrot.slane %v411, 4
      %v599 = vsel %vm189, %v595, %v598
      %v608 = vrot.slane %v464, 4
      %v609 = vrot.slane %v465, 4
      %v610 = vrot.slane %v466, 4
      %v611 = vsel %vm189, %v608, %v610
      %v612 = vrot.slane %v467, 4
      %v613 = vsel %vm189, %v609, %v612
      %s619 = scalar_lea.vmem [#allocation1], 1
      %620 = vst [vmem:[%s619] ss:$2 sm:$0xff] %v561
      %v621 = vld.sshfl [vmem:[#allocation1] sm:$0xff pattern:$0x75316420]
      %v622 = vld.sshfl [vmem:[#allocation1 + $0x8] sm:$0xff pattern:$0x75316420]
      %v625 = vsel %vm189, %v294, %v566
      %v626 = vsel %vm189, %v295, %v567
      %v627 = vsel %vm189, %v354, %v580
      %v628 = vsel %vm189, %v355, %v581
      %v629 = vsel %vm189, %v250, %v594
      %v630 = vsel %vm189, %v251, %v595
      %v631 = vsel %vm189, %v441, %v608
      %v632 = vsel %vm189, %v442, %v609
      %v633 = vsel %vm189, %v491, %v621
      %v634 = vsel %vm189, %v492, %v622
      %v635 = vld [vmem:[%s2] sm:$0xff]
      %v636 = vld [vmem:[%s2 + $0x8] sm:$0xff]
      %v637 = vld [vmem:[%s2 + $0x10] sm:$0xff]
      %v638 = vld [vmem:[%s2 + $0x18] sm:$0xff]
      %vm639 = vcmask 916480
      %v641 = vsel %vm639, %v635, 0
      %v644 = vsel %vm639, %v636, 0
      %v647 = vsel %vm639, %v637, 0
      %v650 = vsel %vm639, %v638, 0
      %652 = vmatpush.msra.mxu0 0.0
      %653 = vmatpush.msra.mxu0 0.0
      %654 = vmatpush.msra.mxu0 %v633
      %655 = vmatpush.msra.mxu0 %v489
      %656 = vmatpush.msra.mxu0 %v611
      %657 = vmatpush.msra.mxu0 %v631
      %658 = vmatpush.msra.mxu0 %v439
      %659 = vmatpush.msra.mxu0 %v597
      %660 = vmatpush.msra.mxu0 %v629
      %661 = vmatpush.msra.mxu0 %v248
      %662 = vmatpush.msra.mxu0 %v583
      %663 = vmatpush.msra.mxu0 %v627
      %664 = vmatpush.msra.mxu0 %v352
      %665 = vmatpush.msra.mxu0 %v569
      %666 = vmatpush.msra.mxu0 %v625
      %667 = vmatpush.msra.mxu0 %v292
      %668 = vmatmul.f32.gmra.mxu0 %v641
      %v669 = vpop.f32.mrf.mxu0
      %v670 = vadd.f32 0.0, %v669
      %671 = vmatmul.f32.gmra.mxu0 %v644
      %v672 = vpop.f32.mrf.mxu0
      %v673 = vadd.f32 0.0, %v672
      %674 = vmatmul.f32.gmra.mxu0 %v647
      %v675 = vpop.f32.mrf.mxu0
      %v676 = vadd.f32 0.0, %v675
      %677 = vmatmul.f32.gmra.mxu0 %v650
      %v678 = vpop.f32.mrf.mxu0
      %v679 = vadd.f32 0.0, %v678
      %680 = vdwg.mxu0
      %681 = vmatpush.msra.mxu0 0.0
      %682 = vmatpush.msra.mxu0 0.0
      %683 = vmatpush.msra.mxu0 %v634
      %684 = vmatpush.msra.mxu0 %v490
      %685 = vmatpush.msra.mxu0 %v613
      %686 = vmatpush.msra.mxu0 %v632
      %687 = vmatpush.msra.mxu0 %v440
      %688 = vmatpush.msra.mxu0 %v599
      %689 = vmatpush.msra.mxu0 %v630
      %690 = vmatpush.msra.mxu0 %v249
      %691 = vmatpush.msra.mxu0 %v585
      %692 = vmatpush.msra.mxu0 %v628
      %693 = vmatpush.msra.mxu0 %v353
      %694 = vmatpush.msra.mxu0 %v571
      %695 = vmatpush.msra.mxu0 %v626
      %696 = vmatpush.msra.mxu0 %v293
      %697 = vmatmul.f32.gmra.mxu0 %v641
      %v698 = vpop.f32.mrf.mxu0
      %v699 = vadd.f32 0.0, %v698
      %700 = vmatmul.f32.gmra.mxu0 %v644
      %v701 = vpop.f32.mrf.mxu0
      %v702 = vadd.f32 0.0, %v701
      %703 = vmatmul.f32.gmra.mxu0 %v647
      %v704 = vpop.f32.mrf.mxu0
      %v705 = vadd.f32 0.0, %v704
      %706 = vmatmul.f32.gmra.mxu0 %v650
      %v707 = vpop.f32.mrf.mxu0
      %v708 = vadd.f32 0.0, %v707
      %709 = vdwg.mxu0
      %v710 = vmax.f32 %v670, 0.0
      %v711 = vmax.f32 %v699, 0.0
      %v712 = vmax.f32 %v673, 0.0
      %v713 = vmax.f32 %v702, 0.0
      %v714 = vmax.f32 %v676, 0.0
      %v715 = vmax.f32 %v705, 0.0
      %v716 = vmax.f32 %v679, 0.0
      %v717 = vmax.f32 %v708, 0.0
      %718 = vst [vmem:[%s170 + $0x10] sm:$0xff] %v710
      %719 = vst [vmem:[%s170 + $0x18] sm:$0xff] %v711
      %720 = vst [vmem:[%s170 + $0x20] sm:$0xff] %v712
      %721 = vst [vmem:[%s170 + $0x28] sm:$0xff] %v713
      %722 = vst [vmem:[%s170 + $0x30] sm:$0xff] %v714
      %723 = vst [vmem:[%s170 + $0x38] sm:$0xff] %v715
      %724 = vst [vmem:[%s170 + $0x40] sm:$0xff] %v716
      %725 = vst [vmem:[%s170 + $0x48] sm:$0xff] %v717
      %p726 = scmp.lt.s32.totalorder %s14, 1
      %s727 = scalar_select %p726, %s14, 1
      %s728 = smul.addr %s727, 10
      %s729 = smul.addr %s728, 8
      %s730 = scalar_lea.vmem %s3, %s729
      // Predicated region
      $region33: #{inception_forward.1} parent=31 // pred_check
        %p731 = pneg %p100
      $region34: #{inception_forward.1} parent=31 // pred_check_branch
        %733 = sbr.rel (%p731) target = $region36
      $region35: #{inception_forward.1} parent=31 // pred_region
        _
      $region36: #{inception_forward.1} parent=31 // pred_fallthru
        _
    $region32: #{inception_forward.1} parent=5 // pred_fallthru
      _
    %p734 = scmp.le.s32.totalorder 2, %s9
    // Predicated region
    $region37: #{inception_forward.1} parent=5 // pred_check
      %p735 = pneg %p734
    $region38: #{inception_forward.1} parent=5 // pred_check_branch
      %737 = sbr.rel (%p735) target = $region40
    $region39: #{inception_forward.1} parent=5 // pred_region
      %s738 = ssub.s32 %s9, 2
      // Predicated region
      $region41: #{inception_forward.1} parent=39 // pred_check
        %p739 = pneg %p106
      $region42: #{inception_forward.1} parent=39 // pred_check_branch
        %741 = sbr.rel (%p739) target = $region44
      $region43: #{inception_forward.1} parent=39 // pred_region
        %p742 = scmp.lt.s32.totalorder %s15, 1
        %s743 = scalar_select %p742, %s15, 1
        %s744 = smul.addr %s743, 10
        %s745 = smul.addr %s744, 8
        %s746 = scalar_lea.vmem %s3, %s745
      $region44: #{inception_forward.1} parent=39 // pred_fallthru
        _
    $region40: #{inception_forward.1} parent=5 // pred_fallthru
      _
  $region6: #{inception_forward.1} parent=0 // loop_footer
    %s13 = sadd.s32 1, %s9
  $region7: #{inception_forward.1} parent=0 // loop_footer_branch
    %8 = sbr.rel target = $region3
  $region8: #{inception_forward.1} parent=0 // loop_exit
    _

</llo_original>
